<compile_context>
chip_gen: v5e
topology: v5e:2x2
jax: 0.10.0
libtpu: 0.0.40
codegen_flags: <defaults>
</compile_context>

<pallas_src>
import jax
import jax.numpy as jnp
from jax.experimental import pallas as pl
from jax.experimental.pallas import tpu as pltpu

_IN_DIM = 32
_OUT_DIM = 32
# Per-row MACs after fc1*fc2 / fc3*fc4 fusion: 32*256 + 256*512 + 512*128 + 128*32
_FUSED_MACS_PER_ROW = 32 * 256 + 256 * 512 + 512 * 128 + 128 * 32  # = 208896

_TB_MAX = 512  # max batch-tile rows (all generations)


def mlp_kernel(x_ref,
               w0_ref, b0_ref,
               w12_ref, b12_ref,
               w34_ref, b34_ref,
               w5_ref, b5_ref,
               o_ref):
    """One batch tile of the fused 4-matmul MLP forward (eval mode => final ReLU)."""
    h = x_ref[...]  # bf16 (cast done in the wrapper)

    # fc0 + relu
    h = jnp.dot(h, w0_ref[...], preferred_element_type=jnp.float32) + b0_ref[...]
    h = jnp.maximum(h, 0.0).astype(jnp.bfloat16)

    # fused fc1*fc2 + relu
    h = jnp.dot(h, w12_ref[...], preferred_element_type=jnp.float32) + b12_ref[...]
    h = jnp.maximum(h, 0.0).astype(jnp.bfloat16)

    # fused fc3*fc4 + relu
    h = jnp.dot(h, w34_ref[...], preferred_element_type=jnp.float32) + b34_ref[...]
    h = jnp.maximum(h, 0.0).astype(jnp.bfloat16)

    # fc5 + eval-mode final relu
    h = jnp.dot(h, w5_ref[...], preferred_element_type=jnp.float32) + b5_ref[...]
    o_ref[...] = jnp.maximum(h, 0.0)


def _round_up(x, m):
    return ((x + m - 1) // m) * m


def _is_v7():
    try:
        return "7" in jax.devices()[0].device_kind.lower()
    except Exception:
        return False


# ---------------------------------------------------------------------------
# Parameters
# ---------------------------------------------------------------------------

_DIMS = [(32, 256), (256, 512), (512, 512), (512, 256), (256, 128), (128, 32)]


def make_params(key):
    """f32 master params, PyTorch-style Linear init; W stored as (in, out)."""
    keys = jax.random.split(key, len(_DIMS))
    params = []
    for k, (fi, fo) in zip(keys, _DIMS):
        kw, kb = jax.random.split(k)
        bound = 1.0 / jnp.sqrt(jnp.float32(fi))
        params.append(jax.random.uniform(kw, (fi, fo), jnp.float32, -bound, bound))
        params.append(jax.random.uniform(kb, (1, fo), jnp.float32, -bound, bound))
    return params  # [w0, b0, w1, b1, ..., w5, b5]


def prepare_kernel_params(params):
    """Fuse the activation-free layer pairs in f32, then cast weights to bf16.

    Returns [w0, b0, w12, b12, w34, b34, w5, b5] with bf16 weights, f32 biases.
    """
    w0, b0, w1, b1, w2, b2, w3, b3, w4, b4, w5, b5 = params
    hi = jax.lax.Precision.HIGHEST
    w12 = jnp.dot(w1, w2, precision=hi)            # (256, 512)
    b12 = jnp.dot(b1, w2, precision=hi) + b2       # (1, 512)
    w34 = jnp.dot(w3, w4, precision=hi)            # (512, 128)
    b34 = jnp.dot(b3, w4, precision=hi) + b4       # (1, 128)
    return [w0.astype(jnp.bfloat16), b0,
            w12.astype(jnp.bfloat16), b12,
            w34.astype(jnp.bfloat16), b34,
            w5.astype(jnp.bfloat16), b5]


# ---------------------------------------------------------------------------
# Forward wrapper
# ---------------------------------------------------------------------------

def regressor_forward(x, kernel_params, tile_rows_max=_TB_MAX):
    """Eval-mode forward of Regressor via a batch-tiled Pallas kernel."""
    B = x.shape[0]
    x = x.astype(jnp.bfloat16)  # halve streamed input DMA; MXU wants bf16 anyway

    # Balanced batch tiles: minimize padded rows instead of padding to TB_MAX.
    n_tiles = max(1, -(-B // tile_rows_max))            # cdiv
    if _is_v7() and B >= 16:
        n_tiles = max(n_tiles, 2)                        # feed both TensorCores
    tb = _round_up(max(1, -(-B // n_tiles)), 8)          # multiple of 8 sublanes
    grid = -(-B // tb)                                   # cdiv
    b_pad = grid * tb
    if b_pad != B:
        x = jnp.pad(x, ((0, b_pad - B), (0, 0)))

    batch_map = lambda i: (i, 0)   # x / out stream over batch tiles
    const_map = lambda i: (0, 0)   # weights / biases: same block every step (VMEM-resident)

    weight_specs = [pl.BlockSpec(p.shape, const_map) for p in kernel_params]
    weight_bytes = sum(int(p.size) * p.dtype.itemsize for p in kernel_params)

    cost = pl.CostEstimate(
        flops=2 * b_pad * _FUSED_MACS_PER_ROW,
        transcendentals=0,
        bytes_accessed=b_pad * (_IN_DIM * 2 + _OUT_DIM * 4) + weight_bytes,
    )

    out = pl.pallas_call(
        mlp_kernel,
        out_shape=jax.ShapeDtypeStruct((b_pad, _OUT_DIM), jnp.float32),
        grid=(grid,),
        in_specs=[pl.BlockSpec((tb, _IN_DIM), batch_map)] + weight_specs,
        out_specs=pl.BlockSpec((tb, _OUT_DIM), batch_map),
        compiler_params=pltpu.CompilerParams(
            dimension_semantics=("parallel",),  # v7x: split batch tiles across 2 TCs
        ),
        cost_estimate=cost,
    )(x, *kernel_params)

    if b_pad != B:
        out = out[:B]
    return out


# ---------------------------------------------------------------------------
# References
# ---------------------------------------------------------------------------

def reference_forward_fused(x, kp):
    """Plain-JAX reference with identical numerics to the kernel (fused bf16)."""
    h = x.astype(jnp.bfloat16)
    h = jnp.dot(h, kp[0], preferred_element_type=jnp.float32) + kp[1]
    h = jnp.maximum(h, 0.0).astype(jnp.bfloat16)
    h = jnp.dot(h, kp[2], preferred_element_type=jnp.float32) + kp[3]
    h = jnp.maximum(h, 0.0).astype(jnp.bfloat16)
    h = jnp.dot(h, kp[4], preferred_element_type=jnp.float32) + kp[5]
    h = jnp.maximum(h, 0.0).astype(jnp.bfloat16)
    h = jnp.dot(h, kp[6], preferred_element_type=jnp.float32) + kp[7]
    return jnp.maximum(h, 0.0)


def reference_forward_f32(x, params):
    """Full-precision, unfused reference matching the PyTorch module exactly."""
    w0, b0, w1, b1, w2, b2, w3, b3, w4, b4, w5, b5 = params
    hi = jax.lax.Precision.HIGHEST
    h = jnp.maximum(jnp.dot(x, w0, precision=hi) + b0, 0.0)
    h = jnp.dot(h, w1, precision=hi) + b1
    h = jnp.maximum(jnp.dot(h, w2, precision=hi) + b2, 0.0)
    h = jnp.dot(h, w3, precision=hi) + b3
    h = jnp.maximum(jnp.dot(h, w4, precision=hi) + b4, 0.0)
    h = jnp.dot(h, w5, precision=hi) + b5
    return jnp.maximum(h, 0.0)  # eval mode


# TODO(synk): fit()/predict() (training loop, masked-MSE loss) are host-side
# training utilities and are intentionally not implemented as kernels.

if __name__ == "__main__":
    key = jax.random.PRNGKey(0)
    k_x, k_p, k_x2 = jax.random.split(key, 3)

    params = make_params(k_p)
    kparams = prepare_kernel_params(params)

    # Small batch (single tile).
    batch = 8
    x = jax.random.normal(k_x, (batch, _IN_DIM), jnp.float32)
    out = regressor_forward(x, kparams)
    jax.block_until_ready(out)
    assert out.shape == (batch, _OUT_DIM) and out.dtype == jnp.float32
    ref = reference_forward_fused(x, kparams)
    assert jnp.allclose(out, ref, atol=2e-2, rtol=2e-2), float(jnp.max(jnp.abs(out - ref)))
    ref_f32 = reference_forward_f32(x, params)
    assert jnp.allclose(out, ref_f32, atol=1e-1, rtol=1e-1), float(jnp.max(jnp.abs(out - ref_f32)))

    # Larger, awkward batch: exercises balanced tiling + row padding (and 2 tiles on v7x).
    batch2 = 300
    x2 = jax.random.normal(k_x2, (batch2, _IN_DIM), jnp.float32)
    out2 = regressor_forward(x2, kparams)
    jax.block_until_ready(out2)
    assert out2.shape == (batch2, _OUT_DIM) and out2.dtype == jnp.float32
    ref2 = reference_forward_fused(x2, kparams)
    assert jnp.allclose(out2, ref2, atol=2e-2, rtol=2e-2), float(jnp.max(jnp.abs(out2 - ref2)))
    ref2_f32 = reference_forward_f32(x2, params)
    assert jnp.allclose(out2, ref2_f32, atol=1e-1, rtol=1e-1), float(jnp.max(jnp.abs(out2 - ref2_f32)))

    print("KERNEL_OK")
</pallas_src>

<mosaic_0001>
module attributes {stable_mosaic.version = 11 : i64} {
  func.func @mlp_kernel(%arg0: i32, %arg1: memref<8x32xbf16, #tpu.memory_space<vmem>>, %arg2: memref<32x256xbf16, #tpu.memory_space<vmem>>, %arg3: memref<1x256xf32, #tpu.memory_space<vmem>>, %arg4: memref<256x512xbf16, #tpu.memory_space<vmem>>, %arg5: memref<1x512xf32, #tpu.memory_space<vmem>>, %arg6: memref<512x128xbf16, #tpu.memory_space<vmem>>, %arg7: memref<1x128xf32, #tpu.memory_space<vmem>>, %arg8: memref<128x32xbf16, #tpu.memory_space<vmem>>, %arg9: memref<1x32xf32, #tpu.memory_space<vmem>>, %arg10: memref<8x32xf32, #tpu.memory_space<vmem>>) attributes {dimension_semantics = [#tpu.dimension_semantics<parallel>], iteration_bounds = array<i64: 1>, scalar_prefetch = 0 : i64, scratch_operands = 0 : i64, tpu.core_type = #tpu.core_type<tc>, window_params = [{transform_indices = @transform_0, window_bounds = array<i64: 8, 32>}, {pipeline_mode = #tpu.pipeline_mode<synchronous>, transform_indices = @transform_1, window_bounds = array<i64: 32, 256>}, {pipeline_mode = #tpu.pipeline_mode<synchronous>, transform_indices = @transform_2, window_bounds = array<i64: 1, 256>}, {pipeline_mode = #tpu.pipeline_mode<synchronous>, transform_indices = @transform_3, window_bounds = array<i64: 256, 512>}, {pipeline_mode = #tpu.pipeline_mode<synchronous>, transform_indices = @transform_4, window_bounds = array<i64: 1, 512>}, {pipeline_mode = #tpu.pipeline_mode<synchronous>, transform_indices = @transform_5, window_bounds = array<i64: 512, 128>}, {pipeline_mode = #tpu.pipeline_mode<synchronous>, transform_indices = @transform_6, window_bounds = array<i64: 1, 128>}, {pipeline_mode = #tpu.pipeline_mode<synchronous>, transform_indices = @transform_7, window_bounds = array<i64: 128, 32>}, {pipeline_mode = #tpu.pipeline_mode<synchronous>, transform_indices = @transform_8, window_bounds = array<i64: 1, 32>}, {transform_indices = @transform_9, window_bounds = array<i64: 8, 32>}]} {
    %c0 = arith.constant 0 : index
    %c0_0 = arith.constant 0 : index
    %0 = vector.load %arg1[%c0, %c0_0] : memref<8x32xbf16, #tpu.memory_space<vmem>>, vector<8x32xbf16>
    %c0_1 = arith.constant 0 : index
    %c0_2 = arith.constant 0 : index
    %1 = vector.load %arg2[%c0_1, %c0_2] : memref<32x256xbf16, #tpu.memory_space<vmem>>, vector<32x256xbf16>
    %cst = arith.constant dense<0.000000e+00> : vector<8x256xf32>
    %2 = tpu.matmul %0, %1, %cst {dimension_numbers = #tpu.dot_dimension_numbers<[1], [0], [0], [1], [0, 0, 1, 1], [], []>} : vector<8x32xbf16>, vector<32x256xbf16>, vector<8x256xf32> -> vector<8x256xf32>
    %c0_3 = arith.constant 0 : index
    %c0_4 = arith.constant 0 : index
    %3 = vector.load %arg3[%c0_3, %c0_4] : memref<1x256xf32, #tpu.memory_space<vmem>>, vector<1x256xf32>
    %4 = vector.broadcast %3 : vector<1x256xf32> to vector<8x256xf32>
    %5 = arith.addf %2, %4 : vector<8x256xf32>
    %cst_5 = arith.constant 0.000000e+00 : f32
    %6 = vector.broadcast %cst_5 : f32 to vector<8x256xf32>
    %7 = arith.maximumf %5, %6 : vector<8x256xf32>
    %8 = arith.truncf %7 : vector<8x256xf32> to vector<8x256xbf16>
    %c0_6 = arith.constant 0 : index
    %c0_7 = arith.constant 0 : index
    %9 = vector.load %arg4[%c0_6, %c0_7] : memref<256x512xbf16, #tpu.memory_space<vmem>>, vector<256x512xbf16>
    %cst_8 = arith.constant dense<0.000000e+00> : vector<8x512xf32>
    %10 = tpu.matmul %8, %9, %cst_8 {dimension_numbers = #tpu.dot_dimension_numbers<[1], [0], [0], [1], [0, 0, 1, 1], [], []>} : vector<8x256xbf16>, vector<256x512xbf16>, vector<8x512xf32> -> vector<8x512xf32>
    %c0_9 = arith.constant 0 : index
    %c0_10 = arith.constant 0 : index
    %11 = vector.load %arg5[%c0_9, %c0_10] : memref<1x512xf32, #tpu.memory_space<vmem>>, vector<1x512xf32>
    %12 = vector.broadcast %11 : vector<1x512xf32> to vector<8x512xf32>
    %13 = arith.addf %10, %12 : vector<8x512xf32>
    %cst_11 = arith.constant 0.000000e+00 : f32
    %14 = vector.broadcast %cst_11 : f32 to vector<8x512xf32>
    %15 = arith.maximumf %13, %14 : vector<8x512xf32>
    %16 = arith.truncf %15 : vector<8x512xf32> to vector<8x512xbf16>
    %c0_12 = arith.constant 0 : index
    %c0_13 = arith.constant 0 : index
    %17 = vector.load %arg6[%c0_12, %c0_13] : memref<512x128xbf16, #tpu.memory_space<vmem>>, vector<512x128xbf16>
    %cst_14 = arith.constant dense<0.000000e+00> : vector<8x128xf32>
    %18 = tpu.matmul %16, %17, %cst_14 {dimension_numbers = #tpu.dot_dimension_numbers<[1], [0], [0], [1], [0, 0, 1, 1], [], []>} : vector<8x512xbf16>, vector<512x128xbf16>, vector<8x128xf32> -> vector<8x128xf32>
    %c0_15 = arith.constant 0 : index
    %c0_16 = arith.constant 0 : index
    %19 = vector.load %arg7[%c0_15, %c0_16] : memref<1x128xf32, #tpu.memory_space<vmem>>, vector<1x128xf32>
    %20 = vector.broadcast %19 : vector<1x128xf32> to vector<8x128xf32>
    %21 = arith.addf %18, %20 : vector<8x128xf32>
    %cst_17 = arith.constant 0.000000e+00 : f32
    %22 = vector.broadcast %cst_17 : f32 to vector<8x128xf32>
    %23 = arith.maximumf %21, %22 : vector<8x128xf32>
    %24 = arith.truncf %23 : vector<8x128xf32> to vector<8x128xbf16>
    %c0_18 = arith.constant 0 : index
    %c0_19 = arith.constant 0 : index
    %25 = vector.load %arg8[%c0_18, %c0_19] : memref<128x32xbf16, #tpu.memory_space<vmem>>, vector<128x32xbf16>
    %cst_20 = arith.constant dense<0.000000e+00> : vector<8x32xf32>
    %26 = tpu.matmul %24, %25, %cst_20 {dimension_numbers = #tpu.dot_dimension_numbers<[1], [0], [0], [1], [0, 0, 1, 1], [], []>} : vector<8x128xbf16>, vector<128x32xbf16>, vector<8x32xf32> -> vector<8x32xf32>
    %c0_21 = arith.constant 0 : index
    %c0_22 = arith.constant 0 : index
    %27 = vector.load %arg9[%c0_21, %c0_22] : memref<1x32xf32, #tpu.memory_space<vmem>>, vector<1x32xf32>
    %28 = vector.broadcast %27 : vector<1x32xf32> to vector<8x32xf32>
    %29 = arith.addf %26, %28 : vector<8x32xf32>
    %cst_23 = arith.constant 0.000000e+00 : f32
    %30 = vector.broadcast %cst_23 : f32 to vector<8x32xf32>
    %31 = arith.maximumf %29, %30 : vector<8x32xf32>
    %c0_24 = arith.constant 0 : index
    %c0_25 = arith.constant 0 : index
    %32 = vector.load %arg10[%c0_24, %c0_25] : memref<8x32xf32, #tpu.memory_space<vmem>>, vector<8x32xf32>
    tpu.vector_store %arg10[%c0_24, %c0_25], %31 {strides = array<i32>} : memref<8x32xf32, #tpu.memory_space<vmem>>, vector<8x32xf32>,
    return
  }
  func.func @transform_0(%arg0: i32) -> (i32, i32) {
    %c0_i32 = arith.constant 0 : i32
    %c0_i32_0 = arith.constant 0 : i32
    return %arg0, %c0_i32 : i32, i32
  }
  func.func @transform_1(%arg0: i32) -> (i32, i32) {
    %c0_i32 = arith.constant 0 : i32
    %c0_i32_0 = arith.constant 0 : i32
    %c0_i32_1 = arith.constant 0 : i32
    return %c0_i32, %c0_i32_0 : i32, i32
  }
  func.func @transform_2(%arg0: i32) -> (i32, i32) {
    %c0_i32 = arith.constant 0 : i32
    %c0_i32_0 = arith.constant 0 : i32
    %c0_i32_1 = arith.constant 0 : i32
    return %c0_i32, %c0_i32_0 : i32, i32
  }
  func.func @transform_3(%arg0: i32) -> (i32, i32) {
    %c0_i32 = arith.constant 0 : i32
    %c0_i32_0 = arith.constant 0 : i32
    %c0_i32_1 = arith.constant 0 : i32
    return %c0_i32, %c0_i32_0 : i32, i32
  }
  func.func @transform_4(%arg0: i32) -> (i32, i32) {
    %c0_i32 = arith.constant 0 : i32
    %c0_i32_0 = arith.constant 0 : i32
    %c0_i32_1 = arith.constant 0 : i32
    return %c0_i32, %c0_i32_0 : i32, i32
  }
  func.func @transform_5(%arg0: i32) -> (i32, i32) {
    %c0_i32 = arith.constant 0 : i32
    %c0_i32_0 = arith.constant 0 : i32
    %c0_i32_1 = arith.constant 0 : i32
    return %c0_i32, %c0_i32_0 : i32, i32
  }
  func.func @transform_6(%arg0: i32) -> (i32, i32) {
    %c0_i32 = arith.constant 0 : i32
    %c0_i32_0 = arith.constant 0 : i32
    %c0_i32_1 = arith.constant 0 : i32
    return %c0_i32, %c0_i32_0 : i32, i32
  }
  func.func @transform_7(%arg0: i32) -> (i32, i32) {
    %c0_i32 = arith.constant 0 : i32
    %c0_i32_0 = arith.constant 0 : i32
    %c0_i32_1 = arith.constant 0 : i32
    return %c0_i32, %c0_i32_0 : i32, i32
  }
  func.func @transform_8(%arg0: i32) -> (i32, i32) {
    %c0_i32 = arith.constant 0 : i32
    %c0_i32_0 = arith.constant 0 : i32
    %c0_i32_1 = arith.constant 0 : i32
    return %c0_i32, %c0_i32_0 : i32, i32
  }
  func.func @transform_9(%arg0: i32) -> (i32, i32) {
    %c0_i32 = arith.constant 0 : i32
    %c0_i32_0 = arith.constant 0 : i32
    return %arg0, %c0_i32 : i32, i32
  }
}

</mosaic_0001>

<llo_original>
// kernel: tpu_custom_call.1
$region0: #{tpu_custom_call.1}
  #allocation0 [shape = 'u32[]', space=smem, size = 0x4, offset = 0x4, fixed_abs, tag = 'smem constant byte address 0x4 - core index']
  #allocation1 [shape = 'u32[72,128]{1,0:T(1,128)}', space=vmem, size = 0x9000, scoped, tag = 'internal scratch']
  %s0 = inlined_call_operand.vmem [shape: bf16[8,32], index: 0, kind: input, shape index: {}]
  %s1 = inlined_call_operand.vmem [shape: bf16[32,256], index: 1, kind: input, shape index: {}]
  %s2 = inlined_call_operand.vmem [shape: f32[1,256], index: 2, kind: input, shape index: {}]
  %s3 = inlined_call_operand.hbm [shape: bf16[256,512], index: 3, kind: input, shape index: {}]
  %s4 = inlined_call_operand.vmem [shape: f32[1,512], index: 4, kind: input, shape index: {}]
  %s5 = inlined_call_operand.hbm [shape: bf16[512,128], index: 5, kind: input, shape index: {}]
  %s6 = inlined_call_operand.vmem [shape: f32[1,128], index: 6, kind: input, shape index: {}]
  %s7 = inlined_call_operand.vmem [shape: bf16[128,32], index: 7, kind: input, shape index: {}]
  %s8 = inlined_call_operand.vmem [shape: f32[1,32], index: 8, kind: input, shape index: {}]
  %s9 = inlined_call_operand.hbm [shape: f32[8,32], index: 9, kind: output, shape index: {}]
  %s10 = sld [smem:[#allocation0]]
  $region54: #{tpu_custom_call.1} parent=0
    _
  %s12 = ssub.s32 1, %s10
  %s13 = scalar_select 0, %s12, %s10
  $region1: #{tpu_custom_call.1} parent=0
    #allocation2 [shape = 'u8[262144]{0}', space=vmem, size = 0x40000, scoped, tag = 'input window, operand 3, single buffered']
    #allocation3 [shape = 's32[1]{0}', space=sflag, size = 0x4, scoped, tag = 'scoped memory for tpu_custom_call.1']
    #allocation4 [shape = 's32[1]{0}', space=sflag, size = 0x4, scoped, tag = 'scoped memory for tpu_custom_call.1']
    #allocation5 [shape = 'u8[131072]{0}', space=vmem, size = 0x20000, scoped, tag = 'input window, operand 5, single buffered']
    #allocation6 [shape = 's32[1]{0}', space=sflag, size = 0x4, scoped, tag = 'scoped memory for tpu_custom_call.1']
    #allocation7 [shape = 'u8[4096]{0}', space=vmem, size = 0x1000, scoped, tag = 'output window, operand 0, single buffered']
    %14 = vsyncpa [#allocation3], 0
    %15 = vsyncpa [#allocation6], 0
    %16 = vsyncpa [#allocation4], 0
    // Predicated region
    $region2: #{tpu_custom_call.1} parent=1 // pred_check
      _
    $region3: #{tpu_custom_call.1} parent=1 // pred_check_branch
      %18 = sbr.rel (0) target = $region5
    $region4: #{tpu_custom_call.1} parent=1 // pred_region
      _
    $region5: #{tpu_custom_call.1} parent=1 // pred_fallthru
      _
    // Predicated region
    $region6: #{tpu_custom_call.1} parent=1 // pred_check
      _
    $region7: #{tpu_custom_call.1} parent=1 // pred_check_branch
      %20 = sbr.rel (0) target = $region9
    $region8: #{tpu_custom_call.1} parent=1 // pred_region
      _
    $region9: #{tpu_custom_call.1} parent=1 // pred_fallthru
      _
    // Predicated region
    $region10: #{tpu_custom_call.1} parent=1 // pred_check
      _
    $region11: #{tpu_custom_call.1} parent=1 // pred_check_branch
      %22 = sbr.rel (0) target = $region13
    $region12: #{tpu_custom_call.1} parent=1 // pred_region
      _
    $region13: #{tpu_custom_call.1} parent=1 // pred_fallthru
      _
    // Predicated region
    $region14: #{tpu_custom_call.1} parent=1 // pred_check
      _
    $region15: #{tpu_custom_call.1} parent=1 // pred_check_branch
      %24 = sbr.rel (0) target = $region17
    $region16: #{tpu_custom_call.1} parent=1 // pred_region
      %26 = vsyncadd [#allocation3], 0
      %s27 = sshll.u32 %s3, 4
      %s28 = int_to_ptr.hbm [resolvable:$true] %s27
      %s29 = sshll.u32 [#allocation2], 4
      %s30 = int_to_ptr.vmem [resolvable:$true] %s29
      %35 = dma.hbm_to_vmem [thread:$0]  %s28, 8192, %s30, [#allocation3], 256, 256, 16
    $region17: #{tpu_custom_call.1} parent=1 // pred_fallthru
      _
    // Predicated region
    $region18: #{tpu_custom_call.1} parent=1 // pred_check
      _
    $region19: #{tpu_custom_call.1} parent=1 // pred_check_branch
      %37 = sbr.rel (0) target = $region21
    $region20: #{tpu_custom_call.1} parent=1 // pred_region
      _
    $region21: #{tpu_custom_call.1} parent=1 // pred_fallthru
      _
    // Predicated region
    $region22: #{tpu_custom_call.1} parent=1 // pred_check
      _
    $region23: #{tpu_custom_call.1} parent=1 // pred_check_branch
      %39 = sbr.rel (0) target = $region25
    $region24: #{tpu_custom_call.1} parent=1 // pred_region
      %41 = vsyncadd [#allocation6], 0
      %s42 = sshll.u32 %s5, 4
      %s43 = int_to_ptr.hbm [resolvable:$true] %s42
      %s44 = sshll.u32 [#allocation5], 4
      %s45 = int_to_ptr.vmem [resolvable:$true] %s44
      %50 = dma.hbm_to_vmem [thread:$0]  %s43, 4096, %s45, [#allocation6], 64, 64, 4
    $region25: #{tpu_custom_call.1} parent=1 // pred_fallthru
      _
    // Predicated region
    $region26: #{tpu_custom_call.1} parent=1 // pred_check
      _
    $region27: #{tpu_custom_call.1} parent=1 // pred_check_branch
      %52 = sbr.rel (0) target = $region29
    $region28: #{tpu_custom_call.1} parent=1 // pred_region
      _
    $region29: #{tpu_custom_call.1} parent=1 // pred_fallthru
      _
    // Predicated region
    $region30: #{tpu_custom_call.1} parent=1 // pred_check
      _
    $region31: #{tpu_custom_call.1} parent=1 // pred_check_branch
      %54 = sbr.rel (0) target = $region33
    $region32: #{tpu_custom_call.1} parent=1 // pred_region
      _
    $region33: #{tpu_custom_call.1} parent=1 // pred_fallthru
      _
    // Predicated region
    $region34: #{tpu_custom_call.1} parent=1 // pred_check
      _
    $region35: #{tpu_custom_call.1} parent=1 // pred_check_branch
      %56 = sbr.rel (0) target = $region37
    $region36: #{tpu_custom_call.1} parent=1 // pred_region
      _
    $region37: #{tpu_custom_call.1} parent=1 // pred_fallthru
      _
    // Predicated region
    $region38: #{tpu_custom_call.1} parent=1 // pred_check
      _
    $region39: #{tpu_custom_call.1} parent=1 // pred_check_branch
      %58 = sbr.rel (0) target = $region41
    $region40: #{tpu_custom_call.1} parent=1 // pred_region
      %60 = dma.done [#allocation3], 8192
    $region41: #{tpu_custom_call.1} parent=1 // pred_fallthru
      _
    // Predicated region
    $region42: #{tpu_custom_call.1} parent=1 // pred_check
      _
    $region43: #{tpu_custom_call.1} parent=1 // pred_check_branch
      %62 = sbr.rel (0) target = $region45
    $region44: #{tpu_custom_call.1} parent=1 // pred_region
      %64 = dma.done [#allocation6], 4096
    $region45: #{tpu_custom_call.1} parent=1 // pred_fallthru
      _
    %v66 = vld [vmem:[%s0] sm:$0xf]
    %v67 = vld [vmem:[%s1] sm:$0xff]
    %v68 = vld [vmem:[%s1 + $0x8] sm:$0xff]
    %v69 = vld [vmem:[%s1 + $0x10] sm:$0xff]
    %v70 = vld [vmem:[%s1 + $0x18] sm:$0xff]
    %v71 = vld [vmem:[%s2] sm:$0x3]
    %v73 = vperm.slane %v71, 0
    %v74 = vperm.slane %v71, 1
    %v81 = vunpack.c.l.b16 %v67
    %v82 = vunpack.c.h.b16 %v67
    %v83 = vunpack.c.l.b16 %v68
    %v84 = vunpack.c.h.b16 %v68
    %v85 = vunpack.c.l.b16 %v69
    %v86 = vunpack.c.h.b16 %v69
    %v87 = vunpack.c.l.b16 %v70
    %v88 = vunpack.c.h.b16 %v70
    %v89 = vpack.c.b16 %v83, %v81
    %v90 = vpack.c.b16 %v84, %v82
    %v91 = vpack.c.b16 %v87, %v85
    %v92 = vpack.c.b16 %v88, %v86
    %vm97 = vcmask 261120
    %v99 = vsel %vm97, %v66, 0
    %101 = vmatpush.bf16.msra.mxu0 0
    %102 = vmatpush.bf16.msra.mxu0 0
    %103 = vmatpush.bf16.msra.mxu0 0
    %104 = vmatpush.bf16.msra.mxu0 0
    %105 = vmatpush.bf16.msra.mxu0 0
    %106 = vmatpush.bf16.msra.mxu0 0
    %107 = vmatpush.bf16.msra.mxu0 %v91
    %108 = vmatpush.bf16.msra.mxu0 %v89
    %109 = vmatmul.bf16.gmra.mxu0 %v99
    %v110 = vpop.f32.mrf.mxu0
    %v111 = vadd.f32 %v73, %v110
    %v112 = vpop.f32.mrf.mxu0
    %113 = vdwg.mxu0
    %114 = vmatpush.bf16.msra.mxu0 0
    %115 = vmatpush.bf16.msra.mxu0 0
    %116 = vmatpush.bf16.msra.mxu0 0
    %117 = vmatpush.bf16.msra.mxu0 0
    %118 = vmatpush.bf16.msra.mxu0 0
    %119 = vmatpush.bf16.msra.mxu0 0
    %120 = vmatpush.bf16.msra.mxu0 %v92
    %121 = vmatpush.bf16.msra.mxu0 %v90
    %122 = vmatmul.bf16.gmra.mxu0 %v99
    %v123 = vpop.f32.mrf.mxu0
    %v124 = vadd.f32 %v74, %v123
    %v125 = vpop.f32.mrf.mxu0
    %126 = vdwg.mxu0
    %v127 = vmax.f32 %v111, 0.0
    %v128 = vmax.f32 %v124, 0.0
    %v129 = vpack.c.bf16 %v127, %v127
    %v130 = vpack.c.bf16 %v128, %v128
    %v131 = vld [vmem:[#allocation2] sm:$0xff]
    %v132 = vld [vmem:[#allocation2 + $0x8] sm:$0xff]
    %v133 = vld [vmem:[#allocation2 + $0x10] sm:$0xff]
    %v134 = vld [vmem:[#allocation2 + $0x18] sm:$0xff]
    %v135 = vld [vmem:[#allocation2 + $0x20] sm:$0xff]
    %v136 = vld [vmem:[#allocation2 + $0x28] sm:$0xff]
    %v137 = vld [vmem:[#allocation2 + $0x30] sm:$0xff]
    %v138 = vld [vmem:[#allocation2 + $0x38] sm:$0xff]
    %v139 = vld [vmem:[#allocation2 + $0x40] sm:$0xff]
    %v140 = vld [vmem:[#allocation2 + $0x48] sm:$0xff]
    %v141 = vld [vmem:[#allocation2 + $0x50] sm:$0xff]
    %v142 = vld [vmem:[#allocation2 + $0x58] sm:$0xff]
    %v143 = vld [vmem:[#allocation2 + $0x60] sm:$0xff]
    %v144 = vld [vmem:[#allocation2 + $0x68] sm:$0xff]
    %v145 = vld [vmem:[#allocation2 + $0x70] sm:$0xff]
    %v146 = vld [vmem:[#allocation2 + $0x78] sm:$0xff]
    %v147 = vld [vmem:[#allocation2 + $0x80] sm:$0xff]
    %v148 = vld [vmem:[#allocation2 + $0x88] sm:$0xff]
    %v149 = vld [vmem:[#allocation2 + $0x90] sm:$0xff]
    %v150 = vld [vmem:[#allocation2 + $0x98] sm:$0xff]
    %v151 = vld [vmem:[#allocation2 + $0xa0] sm:$0xff]
    %v152 = vld [vmem:[#allocation2 + $0xa8] sm:$0xff]
    %v153 = vld [vmem:[#allocation2 + $0xb0] sm:$0xff]
    %v154 = vld [vmem:[#allocation2 + $0xb8] sm:$0xff]
    %v155 = vld [vmem:[#allocation2 + $0xc0] sm:$0xff]
    %v156 = vld [vmem:[#allocation2 + $0xc8] sm:$0xff]
    %v157 = vld [vmem:[#allocation2 + $0xd0] sm:$0xff]
    %v158 = vld [vmem:[#allocation2 + $0xd8] sm:$0xff]
    %v159 = vld [vmem:[#allocation2 + $0xe0] sm:$0xff]
    %v160 = vld [vmem:[#allocation2 + $0xe8] sm:$0xff]
    %v161 = vld [vmem:[#allocation2 + $0xf0] sm:$0xff]
    %v162 = vld [vmem:[#allocation2 + $0xf8] sm:$0xff]
    %v163 = vld [vmem:[#allocation2 + $0x100] sm:$0xff]
    %v164 = vld [vmem:[#allocation2 + $0x108] sm:$0xff]
    %v165 = vld [vmem:[#allocation2 + $0x110] sm:$0xff]
    %v166 = vld [vmem:[#allocation2 + $0x118] sm:$0xff]
    %v167 = vld [vmem:[#allocation2 + $0x120] sm:$0xff]
    %v168 = vld [vmem:[#allocation2 + $0x128] sm:$0xff]
    %v169 = vld [vmem:[#allocation2 + $0x130] sm:$0xff]
    %v170 = vld [vmem:[#allocation2 + $0x138] sm:$0xff]
    %v171 = vld [vmem:[#allocation2 + $0x140] sm:$0xff]
    %v172 = vld [vmem:[#allocation2 + $0x148] sm:$0xff]
    %v173 = vld [vmem:[#allocation2 + $0x150] sm:$0xff]
    %v174 = vld [vmem:[#allocation2 + $0x158] sm:$0xff]
    %v175 = vld [vmem:[#allocation2 + $0x160] sm:$0xff]
    %v176 = vld [vmem:[#allocation2 + $0x168] sm:$0xff]
    %v177 = vld [vmem:[#allocation2 + $0x170] sm:$0xff]
    %v178 = vld [vmem:[#allocation2 + $0x178] sm:$0xff]
    %v179 = vld [vmem:[#allocation2 + $0x180] sm:$0xff]
    %v180 = vld [vmem:[#allocation2 + $0x188] sm:$0xff]
    %v181 = vld [vmem:[#allocation2 + $0x190] sm:$0xff]
    %v182 = vld [vmem:[#allocation2 + $0x198] sm:$0xff]
    %v183 = vld [vmem:[#allocation2 + $0x1a0] sm:$0xff]
    %v184 = vld [vmem:[#allocation2 + $0x1a8] sm:$0xff]
    %v185 = vld [vmem:[#allocation2 + $0x1b0] sm:$0xff]
    %v186 = vld [vmem:[#allocation2 + $0x1b8] sm:$0xff]
    %v187 = vld [vmem:[#allocation2 + $0x1c0] sm:$0xff]
    %v188 = vld [vmem:[#allocation2 + $0x1c8] sm:$0xff]
    %v189 = vld [vmem:[#allocation2 + $0x1d0] sm:$0xff]
    %v190 = vld [vmem:[#allocation2 + $0x1d8] sm:$0xff]
    %v191 = vld [vmem:[#allocation2 + $0x1e0] sm:$0xff]
    %v192 = vld [vmem:[#allocation2 + $0x1e8] sm:$0xff]
    %v193 = vld [vmem:[#allocation2 + $0x1f0] sm:$0xff]
    %v194 = vld [vmem:[#allocation2 + $0x1f8] sm:$0xff]
    %v195 = vld [vmem:[%s4] sm:$0xf]
    %v197 = vperm.slane %v195, 0
    %v198 = vperm.slane %v195, 1
    %v199 = vperm.slane %v195, 2
    %v200 = vperm.slane %v195, 3
    %v269 = vunpack.c.l.b16 %v131
    %v270 = vunpack.c.h.b16 %v131
    %v271 = vunpack.c.l.b16 %v132
    %v272 = vunpack.c.h.b16 %v132
    %v273 = vunpack.c.l.b16 %v133
    %v274 = vunpack.c.h.b16 %v133
    %v275 = vunpack.c.l.b16 %v134
    %v276 = vunpack.c.h.b16 %v134
    %v277 = vunpack.c.l.b16 %v135
    %v278 = vunpack.c.h.b16 %v135
    %v279 = vunpack.c.l.b16 %v136
    %v280 = vunpack.c.h.b16 %v136
    %v281 = vunpack.c.l.b16 %v137
    %v282 = vunpack.c.h.b16 %v137
    %v283 = vunpack.c.l.b16 %v138
    %v284 = vunpack.c.h.b16 %v138
    %v285 = vunpack.c.l.b16 %v139
    %v286 = vunpack.c.h.b16 %v139
    %v287 = vunpack.c.l.b16 %v140
    %v288 = vunpack.c.h.b16 %v140
    %v289 = vunpack.c.l.b16 %v141
    %v290 = vunpack.c.h.b16 %v141
    %v291 = vunpack.c.l.b16 %v142
    %v292 = vunpack.c.h.b16 %v142
    %v293 = vunpack.c.l.b16 %v143
    %v294 = vunpack.c.h.b16 %v143
    %v295 = vunpack.c.l.b16 %v144
    %v296 = vunpack.c.h.b16 %v144
    %v297 = vunpack.c.l.b16 %v145
    %v298 = vunpack.c.h.b16 %v145
    %v299 = vunpack.c.l.b16 %v146
    %v300 = vunpack.c.h.b16 %v146
    %v301 = vunpack.c.l.b16 %v147
    %v302 = vunpack.c.h.b16 %v147
    %v303 = vunpack.c.l.b16 %v148
    %v304 = vunpack.c.h.b16 %v148
    %v305 = vunpack.c.l.b16 %v149
    %v306 = vunpack.c.h.b16 %v149
    %v307 = vunpack.c.l.b16 %v150
    %v308 = vunpack.c.h.b16 %v150
    %v309 = vunpack.c.l.b16 %v151
    %v310 = vunpack.c.h.b16 %v151
    %v311 = vunpack.c.l.b16 %v152
    %v312 = vunpack.c.h.b16 %v152
    %v313 = vunpack.c.l.b16 %v153
    %v314 = vunpack.c.h.b16 %v153
    %v315 = vunpack.c.l.b16 %v154
    %v316 = vunpack.c.h.b16 %v154
    %v317 = vunpack.c.l.b16 %v155
    %v318 = vunpack.c.h.b16 %v155
    %v319 = vunpack.c.l.b16 %v156
    %v320 = vunpack.c.h.b16 %v156
    %v321 = vunpack.c.l.b16 %v157
    %v322 = vunpack.c.h.b16 %v157
    %v323 = vunpack.c.l.b16 %v158
    %v324 = vunpack.c.h.b16 %v158
    %v325 = vunpack.c.l.b16 %v159
    %v326 = vunpack.c.h.b16 %v159
    %v327 = vunpack.c.l.b16 %v160
    %v328 = vunpack.c.h.b16 %v160
    %v329 = vunpack.c.l.b16 %v161
    %v330 = vunpack.c.h.b16 %v161
    %v331 = vunpack.c.l.b16 %v162
    %v332 = vunpack.c.h.b16 %v162
    %v333 = vunpack.c.l.b16 %v163
    %v334 = vunpack.c.h.b16 %v163
    %v335 = vunpack.c.l.b16 %v164
    %v336 = vunpack.c.h.b16 %v164
    %v337 = vunpack.c.l.b16 %v165
    %v338 = vunpack.c.h.b16 %v165
    %v339 = vunpack.c.l.b16 %v166
    %v340 = vunpack.c.h.b16 %v166
    %v341 = vunpack.c.l.b16 %v167
    %v342 = vunpack.c.h.b16 %v167
    %v343 = vunpack.c.l.b16 %v168
    %v344 = vunpack.c.h.b16 %v168
    %v345 = vunpack.c.l.b16 %v169
    %v346 = vunpack.c.h.b16 %v169
    %v347 = vunpack.c.l.b16 %v170
    %v348 = vunpack.c.h.b16 %v170
    %v349 = vunpack.c.l.b16 %v171
    %v350 = vunpack.c.h.b16 %v171
    %v351 = vunpack.c.l.b16 %v172
    %v352 = vunpack.c.h.b16 %v172
    %v353 = vunpack.c.l.b16 %v173
    %v354 = vunpack.c.h.b16 %v173
    %v355 = vunpack.c.l.b16 %v174
    %v356 = vunpack.c.h.b16 %v174
    %v357 = vunpack.c.l.b16 %v175
    %v358 = vunpack.c.h.b16 %v175
    %v359 = vunpack.c.l.b16 %v176
    %v360 = vunpack.c.h.b16 %v176
    %v361 = vunpack.c.l.b16 %v177
    %v362 = vunpack.c.h.b16 %v177
    %v363 = vunpack.c.l.b16 %v178
    %v364 = vunpack.c.h.b16 %v178
    %v365 = vunpack.c.l.b16 %v179
    %v366 = vunpack.c.h.b16 %v179
    %v367 = vunpack.c.l.b16 %v180
    %v368 = vunpack.c.h.b16 %v180
    %v369 = vunpack.c.l.b16 %v181
    %v370 = vunpack.c.h.b16 %v181
    %v371 = vunpack.c.l.b16 %v182
    %v372 = vunpack.c.h.b16 %v182
    %v373 = vunpack.c.l.b16 %v183
    %v374 = vunpack.c.h.b16 %v183
    %v375 = vunpack.c.l.b16 %v184
    %v376 = vunpack.c.h.b16 %v184
    %v377 = vunpack.c.l.b16 %v185
    %v378 = vunpack.c.h.b16 %v185
    %v379 = vunpack.c.l.b16 %v186
    %v380 = vunpack.c.h.b16 %v186
    %v381 = vunpack.c.l.b16 %v187
    %v382 = vunpack.c.h.b16 %v187
    %v383 = vunpack.c.l.b16 %v188
    %v384 = vunpack.c.h.b16 %v188
    %v385 = vunpack.c.l.b16 %v189
    %v386 = vunpack.c.h.b16 %v189
    %v387 = vunpack.c.l.b16 %v190
    %v388 = vunpack.c.h.b16 %v190
    %v389 = vunpack.c.l.b16 %v191
    %v390 = vunpack.c.h.b16 %v191
    %v391 = vunpack.c.l.b16 %v192
    %v392 = vunpack.c.h.b16 %v192
    %v393 = vunpack.c.l.b16 %v193
    %v394 = vunpack.c.h.b16 %v193
    %v395 = vunpack.c.l.b16 %v194
    %v396 = vunpack.c.h.b16 %v194
    %v397 = vpack.c.b16 %v273, %v269
    %v398 = vpack.c.b16 %v274, %v270
    %v399 = vpack.c.b16 %v275, %v271
    %v400 = vpack.c.b16 %v276, %v272
    %v401 = vpack.c.b16 %v281, %v277
    %v402 = vpack.c.b16 %v282, %v278
    %v403 = vpack.c.b16 %v283, %v279
    %v404 = vpack.c.b16 %v284, %v280
    %v405 = vpack.c.b16 %v289, %v285
    %v406 = vpack.c.b16 %v290, %v286
    %v407 = vpack.c.b16 %v291, %v287
    %v408 = vpack.c.b16 %v292, %v288
    %v409 = vpack.c.b16 %v297, %v293
    %v410 = vpack.c.b16 %v298, %v294
    %v411 = vpack.c.b16 %v299, %v295
    %v412 = vpack.c.b16 %v300, %v296
    %v413 = vpack.c.b16 %v305, %v301
    %v414 = vpack.c.b16 %v306, %v302
    %v415 = vpack.c.b16 %v307, %v303
    %v416 = vpack.c.b16 %v308, %v304
    %v417 = vpack.c.b16 %v313, %v309
    %v418 = vpack.c.b16 %v314, %v310
    %v419 = vpack.c.b16 %v315, %v311
    %v420 = vpack.c.b16 %v316, %v312
    %v421 = vpack.c.b16 %v321, %v317
    %v422 = vpack.c.b16 %v322, %v318
    %v423 = vpack.c.b16 %v323, %v319
    %v424 = vpack.c.b16 %v324, %v320
    %v425 = vpack.c.b16 %v329, %v325
    %v426 = vpack.c.b16 %v330, %v326
    %v427 = vpack.c.b16 %v331, %v327
    %v428 = vpack.c.b16 %v332, %v328
    %v429 = vpack.c.b16 %v337, %v333
    %v430 = vpack.c.b16 %v338, %v334
    %v431 = vpack.c.b16 %v339, %v335
    %v432 = vpack.c.b16 %v340, %v336
    %v433 = vpack.c.b16 %v345, %v341
    %v434 = vpack.c.b16 %v346, %v342
    %v435 = vpack.c.b16 %v347, %v343
    %v436 = vpack.c.b16 %v348, %v344
    %v437 = vpack.c.b16 %v353, %v349
    %v438 = vpack.c.b16 %v354, %v350
    %v439 = vpack.c.b16 %v355, %v351
    %v440 = vpack.c.b16 %v356, %v352
    %v441 = vpack.c.b16 %v361, %v357
    %v442 = vpack.c.b16 %v362, %v358
    %v443 = vpack.c.b16 %v363, %v359
    %v444 = vpack.c.b16 %v364, %v360
    %v445 = vpack.c.b16 %v369, %v365
    %v446 = vpack.c.b16 %v370, %v366
    %v447 = vpack.c.b16 %v371, %v367
    %v448 = vpack.c.b16 %v372, %v368
    %v449 = vpack.c.b16 %v377, %v373
    %v450 = vpack.c.b16 %v378, %v374
    %v451 = vpack.c.b16 %v379, %v375
    %v452 = vpack.c.b16 %v380, %v376
    %v453 = vpack.c.b16 %v385, %v381
    %v454 = vpack.c.b16 %v386, %v382
    %v455 = vpack.c.b16 %v387, %v383
    %v456 = vpack.c.b16 %v388, %v384
    %v457 = vpack.c.b16 %v393, %v389
    %v458 = vpack.c.b16 %v394, %v390
    %v459 = vpack.c.b16 %v395, %v391
    %v460 = vpack.c.b16 %v396, %v392
    %525 = vmatpush.bf16.msra.mxu0 %v425
    %526 = vmatpush.bf16.msra.mxu0 %v421
    %527 = vmatpush.bf16.msra.mxu0 %v417
    %528 = vmatpush.bf16.msra.mxu0 %v413
    %529 = vmatpush.bf16.msra.mxu0 %v409
    %530 = vmatpush.bf16.msra.mxu0 %v405
    %531 = vmatpush.bf16.msra.mxu0 %v401
    %532 = vmatpush.bf16.msra.mxu0 %v397
    %533 = vmatmul.bf16.gmra.mxu0 %v129
    %v534 = vpop.f32.mrf.mxu0
    %v535 = vadd.f32 %v197, %v534
    %v536 = vpop.f32.mrf.mxu0
    %537 = vdwg.mxu0
    %538 = vmatpush.bf16.msra.mxu0 %v457
    %539 = vmatpush.bf16.msra.mxu0 %v453
    %540 = vmatpush.bf16.msra.mxu0 %v449
    %541 = vmatpush.bf16.msra.mxu0 %v445
    %542 = vmatpush.bf16.msra.mxu0 %v441
    %543 = vmatpush.bf16.msra.mxu0 %v437
    %544 = vmatpush.bf16.msra.mxu0 %v433
    %545 = vmatpush.bf16.msra.mxu0 %v429
    %546 = vmatmul.bf16.gmra.mxu0 %v130
    %v547 = vpop.f32.mrf.mxu0
    %v548 = vadd.f32 %v535, %v547
    %v549 = vpop.f32.mrf.mxu0
    %550 = vdwg.mxu0
    %551 = vmatpush.bf16.msra.mxu0 %v426
    %552 = vmatpush.bf16.msra.mxu0 %v422
    %553 = vmatpush.bf16.msra.mxu0 %v418
    %554 = vmatpush.bf16.msra.mxu0 %v414
    %555 = vmatpush.bf16.msra.mxu0 %v410
    %556 = vmatpush.bf16.msra.mxu0 %v406
    %557 = vmatpush.bf16.msra.mxu0 %v402
    %558 = vmatpush.bf16.msra.mxu0 %v398
    %559 = vmatmul.bf16.gmra.mxu0 %v129
    %v560 = vpop.f32.mrf.mxu0
    %v561 = vadd.f32 %v198, %v560
    %v562 = vpop.f32.mrf.mxu0
    %563 = vdwg.mxu0
    %564 = vmatpush.bf16.msra.mxu0 %v458
    %565 = vmatpush.bf16.msra.mxu0 %v454
    %566 = vmatpush.bf16.msra.mxu0 %v450
    %567 = vmatpush.bf16.msra.mxu0 %v446
    %568 = vmatpush.bf16.msra.mxu0 %v442
    %569 = vmatpush.bf16.msra.mxu0 %v438
    %570 = vmatpush.bf16.msra.mxu0 %v434
    %571 = vmatpush.bf16.msra.mxu0 %v430
    %572 = vmatmul.bf16.gmra.mxu0 %v130
    %v573 = vpop.f32.mrf.mxu0
    %v574 = vadd.f32 %v561, %v573
    %v575 = vpop.f32.mrf.mxu0
    %576 = vdwg.mxu0
    %577 = vmatpush.bf16.msra.mxu0 %v427
    %578 = vmatpush.bf16.msra.mxu0 %v423
    %579 = vmatpush.bf16.msra.mxu0 %v419
    %580 = vmatpush.bf16.msra.mxu0 %v415
    %581 = vmatpush.bf16.msra.mxu0 %v411
    %582 = vmatpush.bf16.msra.mxu0 %v407
    %583 = vmatpush.bf16.msra.mxu0 %v403
    %584 = vmatpush.bf16.msra.mxu0 %v399
    %585 = vmatmul.bf16.gmra.mxu0 %v129
    %v586 = vpop.f32.mrf.mxu0
    %v587 = vadd.f32 %v199, %v586
    %v588 = vpop.f32.mrf.mxu0
    %589 = vdwg.mxu0
    %590 = vmatpush.bf16.msra.mxu0 %v459
    %591 = vmatpush.bf16.msra.mxu0 %v455
    %592 = vmatpush.bf16.msra.mxu0 %v451
    %593 = vmatpush.bf16.msra.mxu0 %v447
    %594 = vmatpush.bf16.msra.mxu0 %v443
    %595 = vmatpush.bf16.msra.mxu0 %v439
    %596 = vmatpush.bf16.msra.mxu0 %v435
    %597 = vmatpush.bf16.msra.mxu0 %v431
    %598 = vmatmul.bf16.gmra.mxu0 %v130
    %v599 = vpop.f32.mrf.mxu0
    %v600 = vadd.f32 %v587, %v599
    %v601 = vpop.f32.mrf.mxu0
    %602 = vdwg.mxu0
    %603 = vmatpush.bf16.msra.mxu0 %v428
    %604 = vmatpush.bf16.msra.mxu0 %v424
    %605 = vmatpush.bf16.msra.mxu0 %v420
    %606 = vmatpush.bf16.msra.mxu0 %v416
    %607 = vmatpush.bf16.msra.mxu0 %v412
    %608 = vmatpush.bf16.msra.mxu0 %v408
    %609 = vmatpush.bf16.msra.mxu0 %v404
    %610 = vmatpush.bf16.msra.mxu0 %v400
    %611 = vmatmul.bf16.gmra.mxu0 %v129
    %v612 = vpop.f32.mrf.mxu0
    %v613 = vadd.f32 %v200, %v612
    %v614 = vpop.f32.mrf.mxu0
    %615 = vdwg.mxu0
    %616 = vmatpush.bf16.msra.mxu0 %v460
    %617 = vmatpush.bf16.msra.mxu0 %v456
    %618 = vmatpush.bf16.msra.mxu0 %v452
    %619 = vmatpush.bf16.msra.mxu0 %v448
    %620 = vmatpush.bf16.msra.mxu0 %v444
    %621 = vmatpush.bf16.msra.mxu0 %v440
    %622 = vmatpush.bf16.msra.mxu0 %v436
    %623 = vmatpush.bf16.msra.mxu0 %v432
    %624 = vmatmul.bf16.gmra.mxu0 %v130
    %v625 = vpop.f32.mrf.mxu0
    %v626 = vadd.f32 %v613, %v625
    %v627 = vpop.f32.mrf.mxu0
    %628 = vdwg.mxu0
    %v629 = vmax.f32 %v548, 0.0
    %v630 = vmax.f32 %v574, 0.0
    %v631 = vmax.f32 %v600, 0.0
    %v632 = vmax.f32 %v626, 0.0
    %v633 = vpack.c.bf16 %v629, %v629
    %v634 = vpack.c.bf16 %v630, %v630
    %v635 = vpack.c.bf16 %v631, %v631
    %v636 = vpack.c.bf16 %v632, %v632
    %v637 = vld [vmem:[#allocation5] sm:$0xf]
    %v638 = vld [vmem:[#allocation5 + $0x4] sm:$0xf]
    %v639 = vld [vmem:[#allocation5 + $0x8] sm:$0xf]
    %v640 = vld [vmem:[#allocation5 + $0xc] sm:$0xf]
    %v641 = vld [vmem:[#allocation5 + $0x10] sm:$0xf]
    %v642 = vld [vmem:[#allocation5 + $0x14] sm:$0xf]
    %v643 = vld [vmem:[#allocation5 + $0x18] sm:$0xf]
    %v644 = vld [vmem:[#allocation5 + $0x1c] sm:$0xf]
    %v645 = vld [vmem:[#allocation5 + $0x20] sm:$0xf]
    %v646 = vld [vmem:[#allocation5 + $0x24] sm:$0xf]
    %v647 = vld [vmem:[#allocation5 + $0x28] sm:$0xf]
    %v648 = vld [vmem:[#allocation5 + $0x2c] sm:$0xf]
    %v649 = vld [vmem:[#allocation5 + $0x30] sm:$0xf]
    %v650 = vld [vmem:[#allocation5 + $0x34] sm:$0xf]
    %v651 = vld [vmem:[#allocation5 + $0x38] sm:$0xf]
    %v652 = vld [vmem:[#allocation5 + $0x3c] sm:$0xf]
    %v653 = vld [vmem:[#allocation5 + $0x40] sm:$0xf]
    %v654 = vld [vmem:[#allocation5 + $0x44] sm:$0xf]
    %v655 = vld [vmem:[#allocation5 + $0x48] sm:$0xf]
    %v656 = vld [vmem:[#allocation5 + $0x4c] sm:$0xf]
    %v657 = vld [vmem:[#allocation5 + $0x50] sm:$0xf]
    %v658 = vld [vmem:[#allocation5 + $0x54] sm:$0xf]
    %v659 = vld [vmem:[#allocation5 + $0x58] sm:$0xf]
    %v660 = vld [vmem:[#allocation5 + $0x5c] sm:$0xf]
    %v661 = vld [vmem:[#allocation5 + $0x60] sm:$0xf]
    %v662 = vld [vmem:[#allocation5 + $0x64] sm:$0xf]
    %v663 = vld [vmem:[#allocation5 + $0x68] sm:$0xf]
    %v664 = vld [vmem:[#allocation5 + $0x6c] sm:$0xf]
    %v665 = vld [vmem:[#allocation5 + $0x70] sm:$0xf]
    %v666 = vld [vmem:[#allocation5 + $0x74] sm:$0xf]
    %v667 = vld [vmem:[#allocation5 + $0x78] sm:$0xf]
    %v668 = vld [vmem:[#allocation5 + $0x7c] sm:$0xf]
    %v669 = vld [vmem:[#allocation5 + $0x80] sm:$0xf]
    %v670 = vld [vmem:[#allocation5 + $0x84] sm:$0xf]
    %v671 = vld [vmem:[#allocation5 + $0x88] sm:$0xf]
    %v672 = vld [vmem:[#allocation5 + $0x8c] sm:$0xf]
    %v673 = vld [vmem:[#allocation5 + $0x90] sm:$0xf]
    %v674 = vld [vmem:[#allocation5 + $0x94] sm:$0xf]
    %v675 = vld [vmem:[#allocation5 + $0x98] sm:$0xf]
    %v676 = vld [vmem:[#allocation5 + $0x9c] sm:$0xf]
    %v677 = vld [vmem:[#allocation5 + $0xa0] sm:$0xf]
    %v678 = vld [vmem:[#allocation5 + $0xa4] sm:$0xf]
    %v679 = vld [vmem:[#allocation5 + $0xa8] sm:$0xf]
    %v680 = vld [vmem:[#allocation5 + $0xac] sm:$0xf]
    %v681 = vld [vmem:[#allocation5 + $0xb0] sm:$0xf]
    %v682 = vld [vmem:[#allocation5 + $0xb4] sm:$0xf]
    %v683 = vld [vmem:[#allocation5 + $0xb8] sm:$0xf]
    %v684 = vld [vmem:[#allocation5 + $0xbc] sm:$0xf]
    %v685 = vld [vmem:[#allocation5 + $0xc0] sm:$0xf]
    %v686 = vld [vmem:[#allocation5 + $0xc4] sm:$0xf]
    %v687 = vld [vmem:[#allocation5 + $0xc8] sm:$0xf]
    %v688 = vld [vmem:[#allocation5 + $0xcc] sm:$0xf]
    %v689 = vld [vmem:[#allocation5 + $0xd0] sm:$0xf]
    %v690 = vld [vmem:[#allocation5 + $0xd4] sm:$0xf]
    %v691 = vld [vmem:[#allocation5 + $0xd8] sm:$0xf]
    %v692 = vld [vmem:[#allocation5 + $0xdc] sm:$0xf]
    %v693 = vld [vmem:[#allocation5 + $0xe0] sm:$0xf]
    %v694 = vld [vmem:[#allocation5 + $0xe4] sm:$0xf]
    %v695 = vld [vmem:[#allocation5 + $0xe8] sm:$0xf]
    %v696 = vld [vmem:[#allocation5 + $0xec] sm:$0xf]
    %v697 = vld [vmem:[#allocation5 + $0xf0] sm:$0xf]
    %v698 = vld [vmem:[#allocation5 + $0xf4] sm:$0xf]
    %v699 = vld [vmem:[#allocation5 + $0xf8] sm:$0xf]
    %v700 = vld [vmem:[#allocation5 + $0xfc] sm:$0xf]
    %v701 = vld [vmem:[%s6] sm:$0x1]
    %v703 = vperm.slane %v701, 0
    %v769 = vunpack.c.l.b16 %v637
    %v770 = vunpack.c.l.b16 %v638
    %v771 = vunpack.c.l.b16 %v639
    %v772 = vunpack.c.l.b16 %v640
    %v773 = vunpack.c.l.b16 %v641
    %v774 = vunpack.c.l.b16 %v642
    %v775 = vunpack.c.l.b16 %v643
    %v776 = vunpack.c.l.b16 %v644
    %v777 = vunpack.c.l.b16 %v645
    %v778 = vunpack.c.l.b16 %v646
    %v779 = vunpack.c.l.b16 %v647
    %v780 = vunpack.c.l.b16 %v648
    %v781 = vunpack.c.l.b16 %v649
    %v782 = vunpack.c.l.b16 %v650
    %v783 = vunpack.c.l.b16 %v651
    %v784 = vunpack.c.l.b16 %v652
    %v785 = vunpack.c.l.b16 %v653
    %v786 = vunpack.c.l.b16 %v654
    %v787 = vunpack.c.l.b16 %v655
    %v788 = vunpack.c.l.b16 %v656
    %v789 = vunpack.c.l.b16 %v657
    %v790 = vunpack.c.l.b16 %v658
    %v791 = vunpack.c.l.b16 %v659
    %v792 = vunpack.c.l.b16 %v660
    %v793 = vunpack.c.l.b16 %v661
    %v794 = vunpack.c.l.b16 %v662
    %v795 = vunpack.c.l.b16 %v663
    %v796 = vunpack.c.l.b16 %v664
    %v797 = vunpack.c.l.b16 %v665
    %v798 = vunpack.c.l.b16 %v666
    %v799 = vunpack.c.l.b16 %v667
    %v800 = vunpack.c.l.b16 %v668
    %v801 = vunpack.c.l.b16 %v669
    %v802 = vunpack.c.l.b16 %v670
    %v803 = vunpack.c.l.b16 %v671
    %v804 = vunpack.c.l.b16 %v672
    %v805 = vunpack.c.l.b16 %v673
    %v806 = vunpack.c.l.b16 %v674
    %v807 = vunpack.c.l.b16 %v675
    %v808 = vunpack.c.l.b16 %v676
    %v809 = vunpack.c.l.b16 %v677
    %v810 = vunpack.c.l.b16 %v678
    %v811 = vunpack.c.l.b16 %v679
    %v812 = vunpack.c.l.b16 %v680
    %v813 = vunpack.c.l.b16 %v681
    %v814 = vunpack.c.l.b16 %v682
    %v815 = vunpack.c.l.b16 %v683
    %v816 = vunpack.c.l.b16 %v684
    %v817 = vunpack.c.l.b16 %v685
    %v818 = vunpack.c.l.b16 %v686
    %v819 = vunpack.c.l.b16 %v687
    %v820 = vunpack.c.l.b16 %v688
    %v821 = vunpack.c.l.b16 %v689
    %v822 = vunpack.c.l.b16 %v690
    %v823 = vunpack.c.l.b16 %v691
    %v824 = vunpack.c.l.b16 %v692
    %v825 = vunpack.c.l.b16 %v693
    %v826 = vunpack.c.l.b16 %v694
    %v827 = vunpack.c.l.b16 %v695
    %v828 = vunpack.c.l.b16 %v696
    %v829 = vunpack.c.l.b16 %v697
    %v830 = vunpack.c.l.b16 %v698
    %v831 = vunpack.c.l.b16 %v699
    %v832 = vunpack.c.l.b16 %v700
    %v833 = vpack.c.b16 %v770, %v769
    %v834 = vpack.c.b16 %v772, %v771
    %v835 = vpack.c.b16 %v774, %v773
    %v836 = vpack.c.b16 %v776, %v775
    %v837 = vpack.c.b16 %v778, %v777
    %v838 = vpack.c.b16 %v780, %v779
    %v839 = vpack.c.b16 %v782, %v781
    %v840 = vpack.c.b16 %v784, %v783
    %v841 = vpack.c.b16 %v786, %v785
    %v842 = vpack.c.b16 %v788, %v787
    %v843 = vpack.c.b16 %v790, %v789
    %v844 = vpack.c.b16 %v792, %v791
    %v845 = vpack.c.b16 %v794, %v793
    %v846 = vpack.c.b16 %v796, %v795
    %v847 = vpack.c.b16 %v798, %v797
    %v848 = vpack.c.b16 %v800, %v799
    %v849 = vpack.c.b16 %v802, %v801
    %v850 = vpack.c.b16 %v804, %v803
    %v851 = vpack.c.b16 %v806, %v805
    %v852 = vpack.c.b16 %v808, %v807
    %v853 = vpack.c.b16 %v810, %v809
    %v854 = vpack.c.b16 %v812, %v811
    %v855 = vpack.c.b16 %v814, %v813
    %v856 = vpack.c.b16 %v816, %v815
    %v857 = vpack.c.b16 %v818, %v817
    %v858 = vpack.c.b16 %v820, %v819
    %v859 = vpack.c.b16 %v822, %v821
    %v860 = vpack.c.b16 %v824, %v823
    %v861 = vpack.c.b16 %v826, %v825
    %v862 = vpack.c.b16 %v828, %v827
    %v863 = vpack.c.b16 %v830, %v829
    %v864 = vpack.c.b16 %v832, %v831
    %897 = vmatpush.bf16.msra.mxu0 %v840
    %898 = vmatpush.bf16.msra.mxu0 %v839
    %899 = vmatpush.bf16.msra.mxu0 %v838
    %900 = vmatpush.bf16.msra.mxu0 %v837
    %901 = vmatpush.bf16.msra.mxu0 %v836
    %902 = vmatpush.bf16.msra.mxu0 %v835
    %903 = vmatpush.bf16.msra.mxu0 %v834
    %904 = vmatpush.bf16.msra.mxu0 %v833
    %905 = vmatmul.bf16.gmra.mxu0 %v633
    %v906 = vpop.f32.mrf.mxu0
    %v907 = vadd.f32 %v703, %v906
    %v908 = vpop.f32.mrf.mxu0
    %909 = vdwg.mxu0
    %910 = vmatpush.bf16.msra.mxu0 %v848
    %911 = vmatpush.bf16.msra.mxu0 %v847
    %912 = vmatpush.bf16.msra.mxu0 %v846
    %913 = vmatpush.bf16.msra.mxu0 %v845
    %914 = vmatpush.bf16.msra.mxu0 %v844
    %915 = vmatpush.bf16.msra.mxu0 %v843
    %916 = vmatpush.bf16.msra.mxu0 %v842
    %917 = vmatpush.bf16.msra.mxu0 %v841
    %918 = vmatmul.bf16.gmra.mxu0 %v634
    %v919 = vpop.f32.mrf.mxu0
    %v920 = vadd.f32 %v907, %v919
    %v921 = vpop.f32.mrf.mxu0
    %922 = vdwg.mxu0
    %923 = vmatpush.bf16.msra.mxu0 %v856
    %924 = vmatpush.bf16.msra.mxu0 %v855
    %925 = vmatpush.bf16.msra.mxu0 %v854
    %926 = vmatpush.bf16.msra.mxu0 %v853
    %927 = vmatpush.bf16.msra.mxu0 %v852
    %928 = vmatpush.bf16.msra.mxu0 %v851
    %929 = vmatpush.bf16.msra.mxu0 %v850
    %930 = vmatpush.bf16.msra.mxu0 %v849
    %931 = vmatmul.bf16.gmra.mxu0 %v635
    %v932 = vpop.f32.mrf.mxu0
    %v933 = vadd.f32 %v920, %v932
    %v934 = vpop.f32.mrf.mxu0
    %935 = vdwg.mxu0
    %936 = vmatpush.bf16.msra.mxu0 %v864
    %937 = vmatpush.bf16.msra.mxu0 %v863
    %938 = vmatpush.bf16.msra.mxu0 %v862
    %939 = vmatpush.bf16.msra.mxu0 %v861
    %940 = vmatpush.bf16.msra.mxu0 %v860
    %941 = vmatpush.bf16.msra.mxu0 %v859
    %942 = vmatpush.bf16.msra.mxu0 %v858
    %943 = vmatpush.bf16.msra.mxu0 %v857
    %944 = vmatmul.bf16.gmra.mxu0 %v636
    %v945 = vpop.f32.mrf.mxu0
    %v946 = vadd.f32 %v933, %v945
    %v947 = vpop.f32.mrf.mxu0
    %948 = vdwg.mxu0
    %v949 = vmax.f32 %v946, 0.0
    %v950 = vpack.c.bf16 %v949, %v949
    %v951 = vld [vmem:[%s7] sm:$0xf]
    %v952 = vld [vmem:[%s7 + $0x4] sm:$0xf]
    %v953 = vld [vmem:[%s7 + $0x8] sm:$0xf]
    %v954 = vld [vmem:[%s7 + $0xc] sm:$0xf]
    %v955 = vld [vmem:[%s7 + $0x10] sm:$0xf]
    %v956 = vld [vmem:[%s7 + $0x14] sm:$0xf]
    %v957 = vld [vmem:[%s7 + $0x18] sm:$0xf]
    %v958 = vld [vmem:[%s7 + $0x1c] sm:$0xf]
    %v959 = vld [vmem:[%s7 + $0x20] sm:$0xf]
    %v960 = vld [vmem:[%s7 + $0x24] sm:$0xf]
    %v961 = vld [vmem:[%s7 + $0x28] sm:$0xf]
    %v962 = vld [vmem:[%s7 + $0x2c] sm:$0xf]
    %v963 = vld [vmem:[%s7 + $0x30] sm:$0xf]
    %v964 = vld [vmem:[%s7 + $0x34] sm:$0xf]
    %v965 = vld [vmem:[%s7 + $0x38] sm:$0xf]
    %v966 = vld [vmem:[%s7 + $0x3c] sm:$0xf]
    %v967 = vld [vmem:[%s8] sm:$0x1]
    %v969 = vperm.slane %v967, 0
    %v987 = vunpack.c.l.b16 %v951
    %v988 = vunpack.c.l.b16 %v952
    %v989 = vunpack.c.l.b16 %v953
    %v990 = vunpack.c.l.b16 %v954
    %v991 = vunpack.c.l.b16 %v955
    %v992 = vunpack.c.l.b16 %v956
    %v993 = vunpack.c.l.b16 %v957
    %v994 = vunpack.c.l.b16 %v958
    %v995 = vunpack.c.l.b16 %v959
    %v996 = vunpack.c.l.b16 %v960
    %v997 = vunpack.c.l.b16 %v961
    %v998 = vunpack.c.l.b16 %v962
    %v999 = vunpack.c.l.b16 %v963
    %v1000 = vunpack.c.l.b16 %v964
    %v1001 = vunpack.c.l.b16 %v965
    %v1002 = vunpack.c.l.b16 %v966
    %v1003 = vpack.c.b16 %v988, %v987
    %v1004 = vpack.c.b16 %v990, %v989
    %v1005 = vpack.c.b16 %v992, %v991
    %v1006 = vpack.c.b16 %v994, %v993
    %v1007 = vpack.c.b16 %v996, %v995
    %v1008 = vpack.c.b16 %v998, %v997
    %v1009 = vpack.c.b16 %v1000, %v999
    %v1010 = vpack.c.b16 %v1002, %v1001
    %1019 = vmatpush.bf16.msra.mxu0 %v1010
    %1020 = vmatpush.bf16.msra.mxu0 %v1009
    %1021 = vmatpush.bf16.msra.mxu0 %v1008
    %1022 = vmatpush.bf16.msra.mxu0 %v1007
    %1023 = vmatpush.bf16.msra.mxu0 %v1006
    %1024 = vmatpush.bf16.msra.mxu0 %v1005
    %1025 = vmatpush.bf16.msra.mxu0 %v1004
    %1026 = vmatpush.bf16.msra.mxu0 %v1003
    %1027 = vmatmul.bf16.gmra.mxu0 %v950
    %v1028 = vpop.f32.mrf.mxu0
    %v1029 = vadd.f32 %v969, %v1028
    %v1030 = vpop.f32.mrf.mxu0
    %1031 = vdwg.mxu0
    %v1032 = vmax.f32 %v1029, 0.0
    %1033 = vst.msk [vmem:[#allocation7] sm:$0xff] %vm97, %v1032
    // Predicated region
    $region46: #{tpu_custom_call.1} parent=1 // pred_check
      _
    $region47: #{tpu_custom_call.1} parent=1 // pred_check_branch
      %1035 = sbr.rel (0) target = $region49
    $region48: #{tpu_custom_call.1} parent=1 // pred_region
      %1037 = vsyncadd [#allocation4], 0
      %s1039 = sshll.u32 [#allocation7], 4
      %s1040 = int_to_ptr.vmem [resolvable:$true] %s1039
      %s1041 = sshll.u32 %s9, 4
      %s1042 = int_to_ptr.hbm [resolvable:$true] %s1041
      %1044 = dma.vmem_to_hbm [thread:$0]  %s1040, 128, %s1042, [#allocation4]
    $region49: #{tpu_custom_call.1} parent=1 // pred_fallthru
      _
    // Predicated region
    $region50: #{tpu_custom_call.1} parent=1 // pred_check
      _
    $region51: #{tpu_custom_call.1} parent=1 // pred_check_branch
      %1046 = sbr.rel (0) target = $region53
    $region52: #{tpu_custom_call.1} parent=1 // pred_region
      %1048 = dma.done [#allocation4], 128
    $region53: #{tpu_custom_call.1} parent=1 // pred_fallthru
      _
    %1049 = vsyncpa [#allocation3], 1
    %1050 = vsyncpa [#allocation6], 1
    %1051 = vsyncpa [#allocation4], 1

</llo_original>
